<compile_context>
chip_gen: v7x
topology: tpu7x:2x2x1
jax: 0.10.0
libtpu: 0.0.40
codegen_flags: <defaults>
</compile_context>

<pallas_src>
import jax
import jax.numpy as jnp
from jax.experimental import pallas as pl
from jax.experimental.pallas import tpu as pltpu

BN_EPS = 1e-5
NUM_CLASSES = 88
LANE = 128
SUBLANE = 8


def _round_up(n, m):
    return ((n + m - 1) // m) * m


# ---------------------------------------------------------------------------
# Fused kernel: x -> [relu(x @ W'_i + b'_i)]*num_blocks -> x @ Wc + bc
# All refs are VMEM-resident full blocks; intermediates stay in registers/VMEM.
# ---------------------------------------------------------------------------
def _fused_kernel(*refs):
    x_ref = refs[0]
    o_ref = refs[-1]
    params = refs[1:-1]                    # (w0, b0, w1, b1, ..., wc, bc)
    n_layers = len(params) // 2

    h = x_ref[...].astype(jnp.float32)
    for i in range(n_layers):
        w = params[2 * i][...]             # bf16 [k, out_p]
        b = params[2 * i + 1][...]         # f32  [1, out_p]
        k = w.shape[0]
        # Previous layer's output is 128-lane padded with exact zeros; take the
        # real K columns (static vreg-level slice, no data movement to HBM).
        h_in = h if h.shape[1] == k else h[:, :k]
        h = jnp.dot(h_in.astype(jnp.bfloat16), w,
                    preferred_element_type=jnp.float32) + b
        if i < n_layers - 1:
            h = jnp.maximum(h, 0.0)        # BN already folded into w/b; just ReLU
        # Dropout: identity in eval mode.
    o_ref[...] = h.astype(o_ref.dtype)


# ---------------------------------------------------------------------------
# One-time parameter preparation: fold BN, transpose, lane-pad outputs to 128,
# cast weights to bf16 (bias kept f32).
# ---------------------------------------------------------------------------
def prepare_params(params):
    layers = []
    for (w, b, gamma, beta, mean, var) in params["blocks"]:
        scale = gamma * jax.lax.rsqrt(var + BN_EPS)          # (out,)
        w_f = w * scale[:, None]                             # [out, in]
        b_f = (b - mean) * scale + beta
        layers.append((w_f, b_f))
    layers.append(params["classifier"])                      # (wc [out,in], bc)

    prepared = []
    for (w, b) in layers:
        out_f, in_f = w.shape
        out_p = _round_up(out_f, LANE)
        # K (sublane) dim left unpadded (32/16/8 already multiples of 8);
        # only the lane (output) dim is rounded to 128 for lane-dense stores.
        w_t = jnp.zeros((in_f, out_p), jnp.float32).at[:, :out_f].set(w.T)
        b_p = jnp.zeros((1, out_p), jnp.float32).at[0, :out_f].set(b)
        prepared.append((w_t.astype(jnp.bfloat16), b_p))
    return prepared


# ---------------------------------------------------------------------------
# Fused forward: single pallas_call for the whole network.
# Returns the lane-padded (B_p, 128) output; the consumer slices to 88 classes.
# ---------------------------------------------------------------------------
def fused_forward(prepared, x):
    B, f_in = x.shape
    f_out_p = prepared[-1][0].shape[1]

    # Batch tile: sublane-aligned, capped at 256 rows per grid step.
    bm = min(_round_up(B, SUBLANE), 256)
    B_p = _round_up(B, bm)
    if B_p != B:                           # only pad batch when actually needed
        x = jnp.zeros((B_p, f_in), x.dtype).at[:B, :].set(x)

    flat_args = [x]
    in_specs = [pl.BlockSpec((bm, f_in), lambda i: (i, 0))]
    for (w_t, b_p) in prepared:
        flat_args.append(w_t)
        in_specs.append(pl.BlockSpec(w_t.shape, lambda i: (0, 0)))
        flat_args.append(b_p)
        in_specs.append(pl.BlockSpec(b_p.shape, lambda i: (0, 0)))

    out = pl.pallas_call(
        _fused_kernel,
        out_shape=jax.ShapeDtypeStruct((B_p, f_out_p), jnp.float32),
        grid=(B_p // bm,),
        in_specs=in_specs,
        out_specs=pl.BlockSpec((bm, f_out_p), lambda i: (i, 0)),
        compiler_params=pltpu.CompilerParams(
            dimension_semantics=("parallel",)),
    )(*flat_args)
    return out


# ---------------------------------------------------------------------------
# Parameter construction (deterministic, PyTorch-shaped) + pure-JAX reference.
# ---------------------------------------------------------------------------
def init_params(key, hidden_dim, num_blocks):
    params = {"blocks": [], "classifier": None}
    d = hidden_dim
    for _ in range(num_blocks):
        d_out = d // 2
        key, kw, kb = jax.random.split(key, 3)
        bound = 1.0 / jnp.sqrt(d)
        w = jax.random.uniform(kw, (d_out, d), jnp.float32, -bound, bound)   # [out, in]
        b = jax.random.uniform(kb, (d_out,), jnp.float32, -bound, bound)
        gamma = jnp.ones((d_out,), jnp.float32)          # BatchNorm1d default init
        beta = jnp.zeros((d_out,), jnp.float32)
        running_mean = jnp.zeros((d_out,), jnp.float32)
        running_var = jnp.ones((d_out,), jnp.float32)
        params["blocks"].append((w, b, gamma, beta, running_mean, running_var))
        d = d_out
    key, kw, kb = jax.random.split(key, 3)
    bound = 1.0 / jnp.sqrt(d)
    wc = jax.random.uniform(kw, (NUM_CLASSES, d), jnp.float32, -bound, bound)
    bc = jax.random.uniform(kb, (NUM_CLASSES,), jnp.float32, -bound, bound)
    params["classifier"] = (wc, bc)
    return params


def forward_reference(params, x):
    """Pure-JAX f32 reference (eval-mode BN, identity dropout)."""
    for (w, b, gamma, beta, mean, var) in params["blocks"]:
        y = x @ w.T + b
        y = (y - mean) / jnp.sqrt(var + BN_EPS) * gamma + beta
        x = jnp.maximum(y, 0.0)
    wc, bc = params["classifier"]
    return x @ wc.T + bc


# ---------------------------------------------------------------------------
if __name__ == "__main__":
    hidden_dim = 32
    num_blocks = 2
    dropout_ratio = 0.2  # unused at inference
    batch = 8

    key = jax.random.PRNGKey(0)
    key, kx = jax.random.split(key)
    x = jax.random.normal(kx, (batch, hidden_dim), jnp.float32)

    params = init_params(key, hidden_dim, num_blocks)
    prepared = prepare_params(params)          # fold BN, transpose, pad/cast — once

    fwd = jax.jit(fused_forward)
    out = jax.block_until_ready(fwd(prepared, x))
    pred = out[:batch, :NUM_CLASSES]           # slice lane-padded output in consumer

    ref = forward_reference(params, x)
    assert pred.shape == (batch, NUM_CLASSES), pred.shape
    # bf16 weights/activations on the MXU -> looser tolerance than pure f32.
    assert jnp.allclose(pred, ref, atol=3e-2, rtol=3e-2), "mismatch vs reference"

    print("KERNEL_OK")
</pallas_src>

<mosaic_0001>
module attributes {stable_mosaic.version = 11 : i64} {
  func.func @_fused_kernel(%arg0: i32, %arg1: memref<8x32xf32, #tpu.memory_space<vmem>>, %arg2: memref<32x128xbf16, #tpu.memory_space<vmem>>, %arg3: memref<1x128xf32, #tpu.memory_space<vmem>>, %arg4: memref<16x128xbf16, #tpu.memory_space<vmem>>, %arg5: memref<1x128xf32, #tpu.memory_space<vmem>>, %arg6: memref<8x128xbf16, #tpu.memory_space<vmem>>, %arg7: memref<1x128xf32, #tpu.memory_space<vmem>>, %arg8: memref<8x128xf32, #tpu.memory_space<vmem>>) attributes {dimension_semantics = [#tpu.dimension_semantics<parallel>], iteration_bounds = array<i64: 1>, scalar_prefetch = 0 : i64, scratch_operands = 0 : i64, tpu.core_type = #tpu.core_type<tc>, window_params = [{transform_indices = @transform_0, window_bounds = array<i64: 8, 32>}, {pipeline_mode = #tpu.pipeline_mode<synchronous>, transform_indices = @transform_1, window_bounds = array<i64: 32, 128>}, {pipeline_mode = #tpu.pipeline_mode<synchronous>, transform_indices = @transform_2, window_bounds = array<i64: 1, 128>}, {pipeline_mode = #tpu.pipeline_mode<synchronous>, transform_indices = @transform_3, window_bounds = array<i64: 16, 128>}, {pipeline_mode = #tpu.pipeline_mode<synchronous>, transform_indices = @transform_4, window_bounds = array<i64: 1, 128>}, {pipeline_mode = #tpu.pipeline_mode<synchronous>, transform_indices = @transform_5, window_bounds = array<i64: 8, 128>}, {pipeline_mode = #tpu.pipeline_mode<synchronous>, transform_indices = @transform_6, window_bounds = array<i64: 1, 128>}, {transform_indices = @transform_7, window_bounds = array<i64: 8, 128>}]} {
    %c0 = arith.constant 0 : index
    %c0_0 = arith.constant 0 : index
    %0 = vector.load %arg1[%c0, %c0_0] : memref<8x32xf32, #tpu.memory_space<vmem>>, vector<8x32xf32>
    %c0_1 = arith.constant 0 : index
    %c0_2 = arith.constant 0 : index
    %1 = vector.load %arg2[%c0_1, %c0_2] : memref<32x128xbf16, #tpu.memory_space<vmem>>, vector<32x128xbf16>
    %c0_3 = arith.constant 0 : index
    %c0_4 = arith.constant 0 : index
    %2 = vector.load %arg3[%c0_3, %c0_4] : memref<1x128xf32, #tpu.memory_space<vmem>>, vector<1x128xf32>
    %3 = arith.truncf %0 : vector<8x32xf32> to vector<8x32xbf16>
    %cst = arith.constant dense<0.000000e+00> : vector<8x128xf32>
    %4 = tpu.matmul %3, %1, %cst {dimension_numbers = #tpu.dot_dimension_numbers<[1], [0], [0], [1], [0, 0, 1, 1], [], []>} : vector<8x32xbf16>, vector<32x128xbf16>, vector<8x128xf32> -> vector<8x128xf32>
    %5 = vector.broadcast %2 : vector<1x128xf32> to vector<8x128xf32>
    %6 = arith.addf %4, %5 : vector<8x128xf32>
    %cst_5 = arith.constant 0.000000e+00 : f32
    %7 = vector.broadcast %cst_5 : f32 to vector<8x128xf32>
    %8 = arith.maximumf %6, %7 : vector<8x128xf32>
    %c0_6 = arith.constant 0 : index
    %c0_7 = arith.constant 0 : index
    %9 = vector.load %arg4[%c0_6, %c0_7] : memref<16x128xbf16, #tpu.memory_space<vmem>>, vector<16x128xbf16>
    %c0_8 = arith.constant 0 : index
    %c0_9 = arith.constant 0 : index
    %10 = vector.load %arg5[%c0_8, %c0_9] : memref<1x128xf32, #tpu.memory_space<vmem>>, vector<1x128xf32>
    %11 = vector.extract_strided_slice %8 {offsets = [0, 0], sizes = [8, 16], strides = [1, 1]} : vector<8x128xf32> to vector<8x16xf32>
    %12 = arith.truncf %11 : vector<8x16xf32> to vector<8x16xbf16>
    %cst_10 = arith.constant dense<0.000000e+00> : vector<8x128xf32>
    %13 = tpu.matmul %12, %9, %cst_10 {dimension_numbers = #tpu.dot_dimension_numbers<[1], [0], [0], [1], [0, 0, 1, 1], [], []>} : vector<8x16xbf16>, vector<16x128xbf16>, vector<8x128xf32> -> vector<8x128xf32>
    %14 = vector.broadcast %10 : vector<1x128xf32> to vector<8x128xf32>
    %15 = arith.addf %13, %14 : vector<8x128xf32>
    %cst_11 = arith.constant 0.000000e+00 : f32
    %16 = vector.broadcast %cst_11 : f32 to vector<8x128xf32>
    %17 = arith.maximumf %15, %16 : vector<8x128xf32>
    %c0_12 = arith.constant 0 : index
    %c0_13 = arith.constant 0 : index
    %18 = vector.load %arg6[%c0_12, %c0_13] : memref<8x128xbf16, #tpu.memory_space<vmem>>, vector<8x128xbf16>
    %c0_14 = arith.constant 0 : index
    %c0_15 = arith.constant 0 : index
    %19 = vector.load %arg7[%c0_14, %c0_15] : memref<1x128xf32, #tpu.memory_space<vmem>>, vector<1x128xf32>
    %20 = vector.extract_strided_slice %17 {offsets = [0, 0], sizes = [8, 8], strides = [1, 1]} : vector<8x128xf32> to vector<8x8xf32>
    %21 = arith.truncf %20 : vector<8x8xf32> to vector<8x8xbf16>
    %cst_16 = arith.constant dense<0.000000e+00> : vector<8x128xf32>
    %22 = tpu.matmul %21, %18, %cst_16 {dimension_numbers = #tpu.dot_dimension_numbers<[1], [0], [0], [1], [0, 0, 1, 1], [], []>} : vector<8x8xbf16>, vector<8x128xbf16>, vector<8x128xf32> -> vector<8x128xf32>
    %23 = vector.broadcast %19 : vector<1x128xf32> to vector<8x128xf32>
    %24 = arith.addf %22, %23 : vector<8x128xf32>
    %c0_17 = arith.constant 0 : index
    %c0_18 = arith.constant 0 : index
    %25 = vector.load %arg8[%c0_17, %c0_18] : memref<8x128xf32, #tpu.memory_space<vmem>>, vector<8x128xf32>
    tpu.vector_store %arg8[%c0_17, %c0_18], %24 {strides = array<i32>} : memref<8x128xf32, #tpu.memory_space<vmem>>, vector<8x128xf32>,
    return
  }
  func.func @transform_0(%arg0: i32) -> (i32, i32) {
    %c0_i32 = arith.constant 0 : i32
    %c0_i32_0 = arith.constant 0 : i32
    return %arg0, %c0_i32 : i32, i32
  }
  func.func @transform_1(%arg0: i32) -> (i32, i32) {
    %c0_i32 = arith.constant 0 : i32
    %c0_i32_0 = arith.constant 0 : i32
    %c0_i32_1 = arith.constant 0 : i32
    return %c0_i32, %c0_i32_0 : i32, i32
  }
  func.func @transform_2(%arg0: i32) -> (i32, i32) {
    %c0_i32 = arith.constant 0 : i32
    %c0_i32_0 = arith.constant 0 : i32
    %c0_i32_1 = arith.constant 0 : i32
    return %c0_i32, %c0_i32_0 : i32, i32
  }
  func.func @transform_3(%arg0: i32) -> (i32, i32) {
    %c0_i32 = arith.constant 0 : i32
    %c0_i32_0 = arith.constant 0 : i32
    %c0_i32_1 = arith.constant 0 : i32
    return %c0_i32, %c0_i32_0 : i32, i32
  }
  func.func @transform_4(%arg0: i32) -> (i32, i32) {
    %c0_i32 = arith.constant 0 : i32
    %c0_i32_0 = arith.constant 0 : i32
    %c0_i32_1 = arith.constant 0 : i32
    return %c0_i32, %c0_i32_0 : i32, i32
  }
  func.func @transform_5(%arg0: i32) -> (i32, i32) {
    %c0_i32 = arith.constant 0 : i32
    %c0_i32_0 = arith.constant 0 : i32
    %c0_i32_1 = arith.constant 0 : i32
    return %c0_i32, %c0_i32_0 : i32, i32
  }
  func.func @transform_6(%arg0: i32) -> (i32, i32) {
    %c0_i32 = arith.constant 0 : i32
    %c0_i32_0 = arith.constant 0 : i32
    %c0_i32_1 = arith.constant 0 : i32
    return %c0_i32, %c0_i32_0 : i32, i32
  }
  func.func @transform_7(%arg0: i32) -> (i32, i32) {
    %c0_i32 = arith.constant 0 : i32
    %c0_i32_0 = arith.constant 0 : i32
    return %arg0, %c0_i32 : i32, i32
  }
}

</mosaic_0001>

<llo_original>
// kernel: fused_forward.1
$region0: #{fused_forward.1}
  #allocation0 [shape = 'u32[]', space=smem, size = 0x4, offset = 0x4, fixed_abs, tag = 'smem constant byte address 0x4 - core index']
  #allocation1 [shape = 'u32[144,128]{1,0:T(1,128)}', space=vmem, size = 0x12000, scoped, tag = 'internal scratch']
  %s0 = inlined_call_operand.vmem [shape: f32[8,32], index: 0, kind: input, shape index: {}]
  %s1 = inlined_call_operand.hbm [shape: bf16[32,128], index: 1, kind: input, shape index: {}]
  %s2 = inlined_call_operand.vmem [shape: f32[1,128], index: 2, kind: input, shape index: {}]
  %s3 = inlined_call_operand.hbm [shape: bf16[16,128], index: 3, kind: input, shape index: {}]
  %s4 = inlined_call_operand.vmem [shape: f32[1,128], index: 4, kind: input, shape index: {}]
  %s5 = inlined_call_operand.vmem [shape: bf16[8,128], index: 5, kind: input, shape index: {}]
  %s6 = inlined_call_operand.vmem [shape: f32[1,128], index: 6, kind: input, shape index: {}]
  %s7 = inlined_call_operand.hbm [shape: f32[8,128], index: 7, kind: output, shape index: {}]
  %s8 = sld [smem:[#allocation0]]
  $region46: #{fused_forward.1} parent=0
    _
  %s10 = ssub.s32 1, %s8
  %s11 = scalar_select 0, %s10, %s8
  $region1: #{fused_forward.1} parent=0
    #allocation2 [shape = 'u8[8192]{0}', space=vmem, size = 0x2000, scoped, tag = 'input window, operand 1, single buffered']
    #allocation3 [shape = 's32[1]{0}', space=sflag, size = 0x4, scoped, tag = 'scoped memory for fused_forward.1']
    #allocation4 [shape = 's32[1]{0}', space=sflag, size = 0x4, scoped, tag = 'scoped memory for fused_forward.1']
    #allocation5 [shape = 'u8[4096]{0}', space=vmem, size = 0x1000, scoped, tag = 'input window, operand 3, single buffered']
    #allocation6 [shape = 's32[1]{0}', space=sflag, size = 0x4, scoped, tag = 'scoped memory for fused_forward.1']
    #allocation7 [shape = 'u8[4096]{0}', space=vmem, size = 0x1000, scoped, tag = 'output window, operand 0, single buffered']
    %12 = vsyncpa [#allocation3], 0
    %13 = vsyncpa [#allocation6], 0
    %14 = vsyncpa [#allocation4], 0
    // Predicated region
    $region2: #{fused_forward.1} parent=1 // pred_check
      _
    $region3: #{fused_forward.1} parent=1 // pred_check_branch
      %16 = sbr.rel (0) target = $region5
    $region4: #{fused_forward.1} parent=1 // pred_region
      _
    $region5: #{fused_forward.1} parent=1 // pred_fallthru
      _
    // Predicated region
    $region6: #{fused_forward.1} parent=1 // pred_check
      _
    $region7: #{fused_forward.1} parent=1 // pred_check_branch
      %18 = sbr.rel (0) target = $region9
    $region8: #{fused_forward.1} parent=1 // pred_region
      %s20 = ssub.s32 256, 256
      %21 = vsyncadd [#allocation3], %s20
      %s22 = sshll.u32 [#allocation2], 4
      %s23 = int_to_ptr.vmem [resolvable:$true] %s22
      %28 = dma.hbm_to_vmem [thread:$0]  %s1, 256, %s23, [#allocation3], 64, 64, 4
    $region9: #{fused_forward.1} parent=1 // pred_fallthru
      _
    // Predicated region
    $region10: #{fused_forward.1} parent=1 // pred_check
      _
    $region11: #{fused_forward.1} parent=1 // pred_check_branch
      %30 = sbr.rel (0) target = $region13
    $region12: #{fused_forward.1} parent=1 // pred_region
      _
    $region13: #{fused_forward.1} parent=1 // pred_fallthru
      _
    // Predicated region
    $region14: #{fused_forward.1} parent=1 // pred_check
      _
    $region15: #{fused_forward.1} parent=1 // pred_check_branch
      %32 = sbr.rel (0) target = $region17
    $region16: #{fused_forward.1} parent=1 // pred_region
      %s34 = ssub.s32 128, 128
      %35 = vsyncadd [#allocation6], %s34
      %s36 = sshll.u32 [#allocation5], 4
      %s37 = int_to_ptr.vmem [resolvable:$true] %s36
      %42 = dma.hbm_to_vmem [thread:$0]  %s3, 128, %s37, [#allocation6], 64, 64, 4
    $region17: #{fused_forward.1} parent=1 // pred_fallthru
      _
    // Predicated region
    $region18: #{fused_forward.1} parent=1 // pred_check
      _
    $region19: #{fused_forward.1} parent=1 // pred_check_branch
      %44 = sbr.rel (0) target = $region21
    $region20: #{fused_forward.1} parent=1 // pred_region
      _
    $region21: #{fused_forward.1} parent=1 // pred_fallthru
      _
    // Predicated region
    $region22: #{fused_forward.1} parent=1 // pred_check
      _
    $region23: #{fused_forward.1} parent=1 // pred_check_branch
      %46 = sbr.rel (0) target = $region25
    $region24: #{fused_forward.1} parent=1 // pred_region
      _
    $region25: #{fused_forward.1} parent=1 // pred_fallthru
      _
    // Predicated region
    $region26: #{fused_forward.1} parent=1 // pred_check
      _
    $region27: #{fused_forward.1} parent=1 // pred_check_branch
      %48 = sbr.rel (0) target = $region29
    $region28: #{fused_forward.1} parent=1 // pred_region
      _
    $region29: #{fused_forward.1} parent=1 // pred_fallthru
      _
    // Predicated region
    $region30: #{fused_forward.1} parent=1 // pred_check
      _
    $region31: #{fused_forward.1} parent=1 // pred_check_branch
      %50 = sbr.rel (0) target = $region33
    $region32: #{fused_forward.1} parent=1 // pred_region
      %51 = dma.done [#allocation3], 256
    $region33: #{fused_forward.1} parent=1 // pred_fallthru
      _
    // Predicated region
    $region34: #{fused_forward.1} parent=1 // pred_check
      _
    $region35: #{fused_forward.1} parent=1 // pred_check_branch
      %53 = sbr.rel (0) target = $region37
    $region36: #{fused_forward.1} parent=1 // pred_region
      %54 = dma.done [#allocation6], 128
    $region37: #{fused_forward.1} parent=1 // pred_fallthru
      _
    %v56 = vld [vmem:[%s0] sm:$0xff]
    %v57 = vld [vmem:[#allocation2] sm:$0xf]
    %v58 = vld [vmem:[#allocation2 + $0x4] sm:$0xf]
    %v59 = vld [vmem:[#allocation2 + $0x8] sm:$0xf]
    %v60 = vld [vmem:[#allocation2 + $0xc] sm:$0xf]
    %v61 = vld [vmem:[%s2] sm:$0x1]
    %v62 = vpack.c.bf16 %v56, %v56
    %v64 = vlaneseq
    %v65 = vshrl.u32 %v64, 7
    %v66 = vsub.s32 0, %v65
    %v67 = vrot.slane %v61, %v66
    %v73 = vunpack.c.l.b16 %v57
    %v74 = vunpack.c.l.b16 %v58
    %v75 = vunpack.c.l.b16 %v59
    %v76 = vunpack.c.l.b16 %v60
    %v77 = vpack.c.b16 %v74, %v73
    %v78 = vpack.c.b16 %v76, %v75
    %vm81 = vcmask 261120
    %v83 = vsel %vm81, %v62, 0
    %85 = vmatprep.subr.bf16.mxu0 0
    %86 = vmatpush1.bf16.msra.mxu0 %v77
    %87 = vmatprep.subr.bf16.mxu0 0
    %88 = vmatpush1.bf16.msra.mxu0 %v78
    %89 = vmatprep.subr.bf16.mxu0 0
    %90 = vmatpush1.bf16.msra.mxu0 0
    %91 = vmatprep.subr.bf16.mxu0 0
    %92 = vmatpush1.bf16.msra.mxu0 0
    %93 = vmatprep.subr.bf16.mxu0 0
    %94 = vmatpush1.bf16.msra.mxu0 0
    %95 = vmatprep.subr.bf16.mxu0 0
    %96 = vmatpush1.bf16.msra.mxu0 0
    %97 = vmatprep.subr.bf16.mxu0 0
    %98 = vmatpush1.bf16.msra.mxu0 0
    %99 = vmatprep.subr.bf16.mxu0 0
    %100 = vmatpush1.bf16.msra.mxu0 0
    %101 = vmatprep.subr.bf16.mxu0 0
    %102 = vmatpush1.bf16.msra.mxu0 0
    %103 = vmatprep.subr.bf16.mxu0 0
    %104 = vmatpush1.bf16.msra.mxu0 0
    %105 = vmatprep.subr.bf16.mxu0 0
    %106 = vmatpush1.bf16.msra.mxu0 0
    %107 = vmatprep.subr.bf16.mxu0 0
    %108 = vmatpush1.bf16.msra.mxu0 0
    %109 = vmatprep.subr.bf16.mxu0 0
    %110 = vmatpush1.bf16.msra.mxu0 0
    %111 = vmatprep.subr.bf16.mxu0 0
    %112 = vmatpush1.bf16.msra.mxu0 0
    %113 = vmatprep.subr.bf16.mxu0 0
    %114 = vmatpush1.bf16.msra.mxu0 0
    %115 = vmatprep.subr.bf16.mxu0 0
    %116 = vmatpush1.bf16.msra.mxu0 0
    %117 = vmatprep.mubr.bf16.mxu0 0
    %118 = vmatmul.mubr.bf16.gmra.mrb[0].mxu0 %v83
    %v119 = vpop.f32.mrb[0].mxu0
    %v120 = vadd.f32 %v67, %v119
    %v121 = vpop.f32.mrb[0].mxu0
    %v122 = vpop.f32.mrb[0].mxu0
    %v123 = vpop.f32.mrb[0].mxu0
    %124 = vdwg.mxu0
    %v125 = vmax.f32 %v120, 0.0
    %v126 = vld [vmem:[#allocation5] sm:$0xf]
    %v127 = vld [vmem:[#allocation5 + $0x4] sm:$0xf]
    %v128 = vld [vmem:[%s4] sm:$0x1]
    %v129 = vpack.c.bf16 %v125, %v125
    %v131 = vlaneseq
    %v132 = vshrl.u32 %v131, 7
    %v133 = vsub.s32 0, %v132
    %v134 = vrot.slane %v128, %v133
    %v138 = vunpack.c.l.b16 %v126
    %v139 = vunpack.c.l.b16 %v127
    %v140 = vpack.c.b16 %v139, %v138
    %vm142 = vcmask 130048
    %v144 = vsel %vm142, %v129, 0
    %146 = vmatprep.subr.bf16.mxu0 0
    %147 = vmatpush1.bf16.msra.mxu0 %v140
    %148 = vmatprep.subr.bf16.mxu0 0
    %149 = vmatpush1.bf16.msra.mxu0 0
    %150 = vmatprep.subr.bf16.mxu0 0
    %151 = vmatpush1.bf16.msra.mxu0 0
    %152 = vmatprep.subr.bf16.mxu0 0
    %153 = vmatpush1.bf16.msra.mxu0 0
    %154 = vmatprep.subr.bf16.mxu0 0
    %155 = vmatpush1.bf16.msra.mxu0 0
    %156 = vmatprep.subr.bf16.mxu0 0
    %157 = vmatpush1.bf16.msra.mxu0 0
    %158 = vmatprep.subr.bf16.mxu0 0
    %159 = vmatpush1.bf16.msra.mxu0 0
    %160 = vmatprep.subr.bf16.mxu0 0
    %161 = vmatpush1.bf16.msra.mxu0 0
    %162 = vmatprep.subr.bf16.mxu0 0
    %163 = vmatpush1.bf16.msra.mxu0 0
    %164 = vmatprep.subr.bf16.mxu0 0
    %165 = vmatpush1.bf16.msra.mxu0 0
    %166 = vmatprep.subr.bf16.mxu0 0
    %167 = vmatpush1.bf16.msra.mxu0 0
    %168 = vmatprep.subr.bf16.mxu0 0
    %169 = vmatpush1.bf16.msra.mxu0 0
    %170 = vmatprep.subr.bf16.mxu0 0
    %171 = vmatpush1.bf16.msra.mxu0 0
    %172 = vmatprep.subr.bf16.mxu0 0
    %173 = vmatpush1.bf16.msra.mxu0 0
    %174 = vmatprep.subr.bf16.mxu0 0
    %175 = vmatpush1.bf16.msra.mxu0 0
    %176 = vmatprep.subr.bf16.mxu0 0
    %177 = vmatpush1.bf16.msra.mxu0 0
    %178 = vmatprep.mubr.bf16.mxu0 0
    %179 = vmatmul.mubr.bf16.gmra.mrb[0].mxu0 %v144
    %v180 = vpop.f32.mrb[0].mxu0
    %v181 = vadd.f32 %v134, %v180
    %v182 = vpop.f32.mrb[0].mxu0
    %v183 = vpop.f32.mrb[0].mxu0
    %v184 = vpop.f32.mrb[0].mxu0
    %185 = vdwg.mxu0
    %v186 = vmax.f32 %v181, 0.0
    %v187 = vld [vmem:[%s5] sm:$0xf]
    %v188 = vld [vmem:[%s6] sm:$0x1]
    %v189 = vpack.c.bf16 %v186, %v186
    %v191 = vlaneseq
    %v192 = vshrl.u32 %v191, 7
    %v193 = vsub.s32 0, %v192
    %v194 = vrot.slane %v188, %v193
    %vm196 = vcmask 64512
    %v198 = vsel %vm196, %v189, 0
    %vm200 = vcmask 1043456
    %v202 = vsel %vm200, %v187, 0
    %204 = vmatprep.subr.bf16.mxu0 0
    %205 = vmatpush1.bf16.msra.mxu0 %v202
    %206 = vmatprep.subr.bf16.mxu0 0
    %207 = vmatpush1.bf16.msra.mxu0 0
    %208 = vmatprep.subr.bf16.mxu0 0
    %209 = vmatpush1.bf16.msra.mxu0 0
    %210 = vmatprep.subr.bf16.mxu0 0
    %211 = vmatpush1.bf16.msra.mxu0 0
    %212 = vmatprep.subr.bf16.mxu0 0
    %213 = vmatpush1.bf16.msra.mxu0 0
    %214 = vmatprep.subr.bf16.mxu0 0
    %215 = vmatpush1.bf16.msra.mxu0 0
    %216 = vmatprep.subr.bf16.mxu0 0
    %217 = vmatpush1.bf16.msra.mxu0 0
    %218 = vmatprep.subr.bf16.mxu0 0
    %219 = vmatpush1.bf16.msra.mxu0 0
    %220 = vmatprep.subr.bf16.mxu0 0
    %221 = vmatpush1.bf16.msra.mxu0 0
    %222 = vmatprep.subr.bf16.mxu0 0
    %223 = vmatpush1.bf16.msra.mxu0 0
    %224 = vmatprep.subr.bf16.mxu0 0
    %225 = vmatpush1.bf16.msra.mxu0 0
    %226 = vmatprep.subr.bf16.mxu0 0
    %227 = vmatpush1.bf16.msra.mxu0 0
    %228 = vmatprep.subr.bf16.mxu0 0
    %229 = vmatpush1.bf16.msra.mxu0 0
    %230 = vmatprep.subr.bf16.mxu0 0
    %231 = vmatpush1.bf16.msra.mxu0 0
    %232 = vmatprep.subr.bf16.mxu0 0
    %233 = vmatpush1.bf16.msra.mxu0 0
    %234 = vmatprep.subr.bf16.mxu0 0
    %235 = vmatpush1.bf16.msra.mxu0 0
    %236 = vmatprep.mubr.bf16.mxu0 0
    %237 = vmatmul.mubr.bf16.gmra.mrb[0].mxu0 %v198
    %v238 = vpop.f32.mrb[0].mxu0
    %v239 = vadd.f32 %v194, %v238
    %v240 = vpop.f32.mrb[0].mxu0
    %v241 = vpop.f32.mrb[0].mxu0
    %v242 = vpop.f32.mrb[0].mxu0
    %243 = vdwg.mxu0
    %244 = vst [vmem:[#allocation7] sm:$0xff] %v239
    // Predicated region
    $region38: #{fused_forward.1} parent=1 // pred_check
      _
    $region39: #{fused_forward.1} parent=1 // pred_check_branch
      %246 = sbr.rel (0) target = $region41
    $region40: #{fused_forward.1} parent=1 // pred_region
      %s248 = ssub.s32 128, 128
      %249 = vsyncadd [#allocation4], %s248
      %s251 = sshll.u32 [#allocation7], 4
      %s252 = int_to_ptr.vmem [resolvable:$true] %s251
      %254 = dma.vmem_to_hbm [thread:$0]  %s252, 128, %s7, [#allocation4]
    $region41: #{fused_forward.1} parent=1 // pred_fallthru
      _
    // Predicated region
    $region42: #{fused_forward.1} parent=1 // pred_check
      _
    $region43: #{fused_forward.1} parent=1 // pred_check_branch
      %256 = sbr.rel (0) target = $region45
    $region44: #{fused_forward.1} parent=1 // pred_region
      %257 = dma.done [#allocation4], 128
    $region45: #{fused_forward.1} parent=1 // pred_fallthru
      _
    %258 = vsyncpa [#allocation3], 1
    %259 = vsyncpa [#allocation6], 1
    %260 = vsyncpa [#allocation4], 1

</llo_original>
